<compile_context>
chip_gen: v7x
topology: tpu7x:2x2x1
jax: 0.10.0
libtpu: 0.0.40
codegen_flags: <defaults>
</compile_context>

<pallas_src>
import numpy as np
import jax
import jax.numpy as jnp
from jax.experimental import pallas as pl
from jax.experimental.pallas import tpu as pltpu

QUBIT_NUM = 2
LAYER_NUM = 2
SHIFT = np.pi / 2.0  # only used by the custom backward; forward-only here

_LANES = 128
_SUBLANES = 8
_MIN_TILE = _SUBLANES * _LANES     # 1024 samples -> one dense (8,128) f32 slab per feature row
_MAX_TILE = 64 * 1024              # 64K samples -> 1 MiB input block, ~2.5 MiB double-buffered


# ----------------------- glue: build the 4x4 circuit unitary -----------------------

def _rz(theta):
    return jnp.array(
        [[jnp.exp(-0.5j * theta), 0.0 + 0.0j],
         [0.0 + 0.0j, jnp.exp(0.5j * theta)]], dtype=jnp.complex64)


def _ry(theta):
    c = jnp.cos(theta / 2.0).astype(jnp.complex64)
    s = jnp.sin(theta / 2.0).astype(jnp.complex64)
    return jnp.array([[c, -s], [s, c]], dtype=jnp.complex64)


_CX = jnp.array([[1, 0, 0, 0],
                 [0, 1, 0, 0],
                 [0, 0, 0, 1],
                 [0, 0, 1, 0]], dtype=jnp.complex64)  # control=q0 (MSB), target=q1


def build_total_unitary(weights, layer_num):
    """Replicates VariationalClassifier.build_circuit.

    NOTE: the source indexes weights[i * layer_num + k]; with LAYER_NUM=2 the
    two layers share weights 2..5 and weights 8..11 are unused.  Kept verbatim
    for fidelity with the original module.
    The trailing `Z on q0` gate of the source circuit is omitted: it is a
    diagonal +/-1 factor that cancels in the measurement probabilities, i.e.
    it has no effect on the forward output.
    """
    U = jnp.eye(4, dtype=jnp.complex64)
    for i in range(layer_num):
        w = lambda k: weights[i * layer_num + k]          # noqa: E731 (match source)
        A = _rz(w(2)) @ _ry(w(1)) @ _rz(w(0))             # single-qubit chain on q0
        B = _rz(w(5)) @ _ry(w(4)) @ _rz(w(3))             # single-qubit chain on q1
        U = _CX @ jnp.kron(A, B) @ U
    return U


def build_measurement_matrix(weights, layer_num):
    """M = Re(U^H diag(z) U); real symmetric 4x4, z = Z on q0 (MSB)."""
    U = build_total_unitary(weights, layer_num)
    z = jnp.array([1.0, 1.0, -1.0, -1.0], dtype=jnp.float32)
    H = jnp.conj(U).T @ (z[:, None].astype(jnp.complex64) * U)
    return jnp.real(H).astype(jnp.float32)


def build_measurement_coeffs(weights, layer_num):
    """10 coefficients of the symmetric quadratic form:
       [M00, M11, M22, M33, 2M01, 2M02, 2M03, 2M12, 2M13, 2M23]."""
    M = build_measurement_matrix(weights, layer_num)
    return jnp.stack([
        M[0, 0], M[1, 1], M[2, 2], M[3, 3],
        2.0 * M[0, 1], 2.0 * M[0, 2], 2.0 * M[0, 3],
        2.0 * M[1, 2], 2.0 * M[1, 3], 2.0 * M[2, 3],
    ]).astype(jnp.float32)


# ------------------------------ Pallas kernel (hot path) ---------------------------

def _qexp_kernel(ft_ref, m_ref, b_ref, out_ref):
    # ft_ref:  (4, tile_rows, 128) -- batch on (sublane, lane); fully dense slabs.
    # m_ref:   (10,) SMEM: [M00,M11,M22,M33, 2M01,2M02,2M03, 2M12,2M13, 2M23]
    # b_ref:   (1,)  SMEM bias
    # out_ref: (tile_rows, 128)
    f0 = ft_ref[0]
    f1 = ft_ref[1]
    f2 = ft_ref[2]
    f3 = ft_ref[3]

    # Hoist all SMEM scalar reads above the vector math.
    c00 = m_ref[0]
    c11 = m_ref[1]
    c22 = m_ref[2]
    c33 = m_ref[3]
    c01 = m_ref[4]
    c02 = m_ref[5]
    c03 = m_ref[6]
    c12 = m_ref[7]
    c13 = m_ref[8]
    c23 = m_ref[9]
    b = b_ref[0]

    acc = (c00 * (f0 * f0) + c11 * (f1 * f1) + c22 * (f2 * f2) + c33 * (f3 * f3)
           + c01 * (f0 * f1) + c02 * (f0 * f2) + c03 * (f0 * f3)
           + c12 * (f1 * f2) + c13 * (f1 * f3) + c23 * (f2 * f3))

    out_ref[...] = acc + b                              # lane+sublane dense store


def _pick_tile(n):
    # >= 2 grid steps when possible (v7x dual TensorCore), big enough to
    # amortize the ~0.35 us per-grid-step overhead, small enough that the
    # double-buffered pipeline stays far below v5e's 16 MiB scoped VMEM.
    target = max(_MIN_TILE, -(-n // 2))                  # ceil(n / 2)
    tile = -(-target // _MIN_TILE) * _MIN_TILE           # round up to 1024
    return min(tile, _MAX_TILE)


def quantum_model_forward(weights, bias, features, tile_n=None):
    """Pallas-backed equivalent of QuantumModel.forward (expectations + bias)."""
    n = features.shape[0]
    if tile_n is None:
        tile_n = _pick_tile(n)
    else:
        # Validate: tiles must be a multiple of 8*128=1024 samples so the dense
        # (tile_rows, 128) layout honors the (8, 128) tiling constraint.
        tile_n = max(_MIN_TILE, -(-int(tile_n) // _MIN_TILE) * _MIN_TILE)

    n_pad = pl.cdiv(n, tile_n) * tile_n
    rows_total = n_pad // _LANES
    rows_per_tile = tile_n // _LANES

    coeffs = build_measurement_coeffs(weights, LAYER_NUM)           # (10,)
    bias1 = jnp.reshape(bias.astype(jnp.float32), (1,))

    # Repack: (N, 4) -> pad batch -> (4, n_pad) -> (4, n_pad/128, 128).
    f = features.astype(jnp.float32)
    if n_pad != n:
        f = jnp.pad(f, ((0, n_pad - n), (0, 0)))
    ft = f.T.reshape(4, rows_total, _LANES)

    out = pl.pallas_call(
        _qexp_kernel,
        out_shape=jax.ShapeDtypeStruct((rows_total, _LANES), jnp.float32),
        grid=(n_pad // tile_n,),
        in_specs=[
            pl.BlockSpec((4, rows_per_tile, _LANES), lambda i: (0, i, 0)),
            pl.BlockSpec(memory_space=pltpu.MemorySpace.SMEM),
            pl.BlockSpec(memory_space=pltpu.MemorySpace.SMEM),
        ],
        out_specs=pl.BlockSpec((rows_per_tile, _LANES), lambda i: (i, 0)),
        compiler_params=pltpu.CompilerParams(
            dimension_semantics=("parallel",)),
    )(ft, coeffs, bias1)
    return out.reshape(n_pad)[:n]


# -------------------------------------- main ---------------------------------------

if __name__ == "__main__":
    key = jax.random.PRNGKey(0)
    kx, kw = jax.random.split(key)

    # Synthetic stand-in for the iris preprocessing in the original script:
    # 2 raw features, pad with 0.3 and 0.0, then L2-normalize each row.
    n = 2500  # with tile_n=1024 pads to 3072 -> 3-step grid (exercises pipeline + padding)
    Xdata = jax.random.normal(kx, (n, 2), dtype=jnp.float32)
    padding = 0.3 * jnp.ones((n, 1), dtype=jnp.float32)
    X_pad = jnp.concatenate([Xdata, padding, jnp.zeros((n, 1), jnp.float32)], axis=1)
    norm = jnp.sqrt(jnp.sum(X_pad ** 2, axis=-1, keepdims=True))
    features = X_pad / norm                                   # (n, 4)

    # Deterministic parameters (same shapes as the module's __init__).
    weights = 0.01 * jax.random.normal(kw, (LAYER_NUM * QUBIT_NUM * 3,), dtype=jnp.float32)
    bias = jnp.float32(0.05)

    out = quantum_model_forward(weights, bias, features, tile_n=1024)
    out = jax.block_until_ready(out)

    # Pure-JAX reference (full complex state evolution, no folding) as the gate.
    U = build_total_unitary(weights, LAYER_NUM)
    state = features.astype(jnp.complex64) @ U.T
    probs = jnp.abs(state) ** 2
    zsign = jnp.array([1.0, 1.0, -1.0, -1.0], dtype=jnp.float32)
    ref = probs @ zsign + bias
    assert out.shape == (n,)
    assert jnp.allclose(out, ref, atol=1e-4), (out, ref)

    # Also exercise the default (auto) tile heuristic once.
    out2 = jax.block_until_ready(quantum_model_forward(weights, bias, features))
    assert jnp.allclose(out2, ref, atol=1e-4)

    # TODO(synk): the custom parameter-shift backward (QuantumFunction.backward)
    # is not implemented; this script covers the forward pass only.
    print("KERNEL_OK")
</pallas_src>

<mosaic_0001>
module attributes {stable_mosaic.version = 11 : i64} {
  func.func @_qexp_kernel(%arg0: i32, %arg1: memref<4x8x128xf32, #tpu.memory_space<vmem>>, %arg2: memref<10xf32, #tpu.memory_space<smem>>, %arg3: memref<1xf32, #tpu.memory_space<smem>>, %arg4: memref<8x128xf32, #tpu.memory_space<vmem>>) attributes {dimension_semantics = [#tpu.dimension_semantics<parallel>], iteration_bounds = array<i64: 3>, scalar_prefetch = 0 : i64, scratch_operands = 0 : i64, tpu.core_type = #tpu.core_type<tc>, window_params = [{transform_indices = @transform_0, window_bounds = array<i64: 4, 8, 128>}, {transform_indices = @transform_1, window_bounds = array<i64: 10>}, {transform_indices = @transform_2, window_bounds = array<i64: 1>}, {transform_indices = @transform_3, window_bounds = array<i64: 8, 128>}]} {
    %c0 = arith.constant 0 : index
    %c0_0 = arith.constant 0 : index
    %c0_1 = arith.constant 0 : index
    %0 = vector.load %arg1[%c0, %c0_0, %c0_1] : memref<4x8x128xf32, #tpu.memory_space<vmem>>, vector<1x8x128xf32>
    %1 = vector.shape_cast %0 : vector<1x8x128xf32> to vector<8x128xf32>
    %c1 = arith.constant 1 : index
    %c0_2 = arith.constant 0 : index
    %c0_3 = arith.constant 0 : index
    %2 = vector.load %arg1[%c1, %c0_2, %c0_3] : memref<4x8x128xf32, #tpu.memory_space<vmem>>, vector<1x8x128xf32>
    %3 = vector.shape_cast %2 : vector<1x8x128xf32> to vector<8x128xf32>
    %c2 = arith.constant 2 : index
    %c0_4 = arith.constant 0 : index
    %c0_5 = arith.constant 0 : index
    %4 = vector.load %arg1[%c2, %c0_4, %c0_5] : memref<4x8x128xf32, #tpu.memory_space<vmem>>, vector<1x8x128xf32>
    %5 = vector.shape_cast %4 : vector<1x8x128xf32> to vector<8x128xf32>
    %c3 = arith.constant 3 : index
    %c0_6 = arith.constant 0 : index
    %c0_7 = arith.constant 0 : index
    %6 = vector.load %arg1[%c3, %c0_6, %c0_7] : memref<4x8x128xf32, #tpu.memory_space<vmem>>, vector<1x8x128xf32>
    %7 = vector.shape_cast %6 : vector<1x8x128xf32> to vector<8x128xf32>
    %c0_8 = arith.constant 0 : index
    %8 = memref.load %arg2[%c0_8] : memref<10xf32, #tpu.memory_space<smem>>
    %c1_9 = arith.constant 1 : index
    %9 = memref.load %arg2[%c1_9] : memref<10xf32, #tpu.memory_space<smem>>
    %c2_10 = arith.constant 2 : index
    %10 = memref.load %arg2[%c2_10] : memref<10xf32, #tpu.memory_space<smem>>
    %c3_11 = arith.constant 3 : index
    %11 = memref.load %arg2[%c3_11] : memref<10xf32, #tpu.memory_space<smem>>
    %c4 = arith.constant 4 : index
    %12 = memref.load %arg2[%c4] : memref<10xf32, #tpu.memory_space<smem>>
    %c5 = arith.constant 5 : index
    %13 = memref.load %arg2[%c5] : memref<10xf32, #tpu.memory_space<smem>>
    %c6 = arith.constant 6 : index
    %14 = memref.load %arg2[%c6] : memref<10xf32, #tpu.memory_space<smem>>
    %c7 = arith.constant 7 : index
    %15 = memref.load %arg2[%c7] : memref<10xf32, #tpu.memory_space<smem>>
    %c8 = arith.constant 8 : index
    %16 = memref.load %arg2[%c8] : memref<10xf32, #tpu.memory_space<smem>>
    %c9 = arith.constant 9 : index
    %17 = memref.load %arg2[%c9] : memref<10xf32, #tpu.memory_space<smem>>
    %c0_12 = arith.constant 0 : index
    %18 = memref.load %arg3[%c0_12] : memref<1xf32, #tpu.memory_space<smem>>
    %19 = arith.mulf %1, %1 : vector<8x128xf32>
    %20 = vector.broadcast %8 : f32 to vector<8x128xf32>
    %21 = arith.mulf %20, %19 : vector<8x128xf32>
    %22 = arith.mulf %3, %3 : vector<8x128xf32>
    %23 = vector.broadcast %9 : f32 to vector<8x128xf32>
    %24 = arith.mulf %23, %22 : vector<8x128xf32>
    %25 = arith.addf %21, %24 : vector<8x128xf32>
    %26 = arith.mulf %5, %5 : vector<8x128xf32>
    %27 = vector.broadcast %10 : f32 to vector<8x128xf32>
    %28 = arith.mulf %27, %26 : vector<8x128xf32>
    %29 = arith.addf %25, %28 : vector<8x128xf32>
    %30 = arith.mulf %7, %7 : vector<8x128xf32>
    %31 = vector.broadcast %11 : f32 to vector<8x128xf32>
    %32 = arith.mulf %31, %30 : vector<8x128xf32>
    %33 = arith.addf %29, %32 : vector<8x128xf32>
    %34 = arith.mulf %1, %3 : vector<8x128xf32>
    %35 = vector.broadcast %12 : f32 to vector<8x128xf32>
    %36 = arith.mulf %35, %34 : vector<8x128xf32>
    %37 = arith.addf %33, %36 : vector<8x128xf32>
    %38 = arith.mulf %1, %5 : vector<8x128xf32>
    %39 = vector.broadcast %13 : f32 to vector<8x128xf32>
    %40 = arith.mulf %39, %38 : vector<8x128xf32>
    %41 = arith.addf %37, %40 : vector<8x128xf32>
    %42 = arith.mulf %1, %7 : vector<8x128xf32>
    %43 = vector.broadcast %14 : f32 to vector<8x128xf32>
    %44 = arith.mulf %43, %42 : vector<8x128xf32>
    %45 = arith.addf %41, %44 : vector<8x128xf32>
    %46 = arith.mulf %3, %5 : vector<8x128xf32>
    %47 = vector.broadcast %15 : f32 to vector<8x128xf32>
    %48 = arith.mulf %47, %46 : vector<8x128xf32>
    %49 = arith.addf %45, %48 : vector<8x128xf32>
    %50 = arith.mulf %3, %7 : vector<8x128xf32>
    %51 = vector.broadcast %16 : f32 to vector<8x128xf32>
    %52 = arith.mulf %51, %50 : vector<8x128xf32>
    %53 = arith.addf %49, %52 : vector<8x128xf32>
    %54 = arith.mulf %5, %7 : vector<8x128xf32>
    %55 = vector.broadcast %17 : f32 to vector<8x128xf32>
    %56 = arith.mulf %55, %54 : vector<8x128xf32>
    %57 = arith.addf %53, %56 : vector<8x128xf32>
    %58 = vector.broadcast %18 : f32 to vector<8x128xf32>
    %59 = arith.addf %57, %58 : vector<8x128xf32>
    %c0_13 = arith.constant 0 : index
    %c0_14 = arith.constant 0 : index
    %60 = vector.load %arg4[%c0_13, %c0_14] : memref<8x128xf32, #tpu.memory_space<vmem>>, vector<8x128xf32>
    tpu.vector_store %arg4[%c0_13, %c0_14], %59 {strides = array<i32>} : memref<8x128xf32, #tpu.memory_space<vmem>>, vector<8x128xf32>,
    return
  }
  func.func @transform_0(%arg0: i32) -> (i32, i32, i32) {
    %c0_i32 = arith.constant 0 : i32
    %c0_i32_0 = arith.constant 0 : i32
    %c0_i32_1 = arith.constant 0 : i32
    return %c0_i32, %arg0, %c0_i32_0 : i32, i32, i32
  }
  func.func @transform_1(%arg0: i32) -> i32 {
    %c0_i32 = arith.constant 0 : i32
    %c0_i32_0 = arith.constant 0 : i32
    return %c0_i32 : i32
  }
  func.func @transform_2(%arg0: i32) -> i32 {
    %c0_i32 = arith.constant 0 : i32
    %c0_i32_0 = arith.constant 0 : i32
    return %c0_i32 : i32
  }
  func.func @transform_3(%arg0: i32) -> (i32, i32) {
    %c0_i32 = arith.constant 0 : i32
    %c0_i32_0 = arith.constant 0 : i32
    return %arg0, %c0_i32 : i32, i32
  }
}

</mosaic_0001>

<llo_original>
// kernel: tpu_custom_call.1
$region0: #{tpu_custom_call.1}
  #allocation0 [shape = 'u32[]', space=smem, size = 0x4, offset = 0x4, fixed_abs, tag = 'smem constant byte address 0x4 - core index']
  #allocation1 [shape = 'u32[144,128]{1,0:T(1,128)}', space=vmem, size = 0x12000, scoped, tag = 'internal scratch']
  #allocation2 [shape = 'f32[1]{0:T(128)S(6)}', space=smem, size = 0x200, scoped, tag = 'scoped memory for tpu_custom_call.1']
  %s0 = inlined_call_operand.hbm [shape: f32[4,24,128], index: 0, kind: input, shape index: {}]
  %s1 = inlined_call_operand.vmem [shape: f32[10], index: 1, kind: input, shape index: {}]
  %s2 = inlined_call_operand.<no memory space> [shape: f32[1], index: 2, kind: input, shape index: {}]
  %s3 = inlined_call_operand.hbm [shape: f32[24,128], index: 3, kind: output, shape index: {}]
  %s4 = sld [smem:[#allocation0]]
  $region53: #{tpu_custom_call.1} parent=0
    _
  %s6 = ssub.s32 1, %s4
  %s7 = scalar_select 0, %s6, %s4
  %8 = sst [smem:[#allocation2]] %s2
  $region1: #{tpu_custom_call.1} parent=0
    #allocation3 [shape = 'u8[32768]{0}', space=vmem, size = 0x8000, scoped, tag = 'input window, operand 0']
    #allocation4 [shape = 's32[2]{0}', space=sflag, size = 0x8, scoped, tag = 'scoped memory for tpu_custom_call.1']
    #allocation5 [shape = 's32[2]{0}', space=sflag, size = 0x8, scoped, tag = 'scoped memory for tpu_custom_call.1']
    #allocation6 [shape = 's32[2]{0}', space=sflag, size = 0x8, scoped, tag = 'scoped memory for tpu_custom_call.1']
    #allocation7 [shape = 'u8[512]{0}', space=smem, size = 0x200, scoped, tag = 'input window, operand 1, single buffered']
    #allocation8 [shape = 'u8[8192]{0}', space=vmem, size = 0x2000, scoped, tag = 'output window, operand 0']
    %9 = vsyncpa [#allocation4], 0
    %s10 = scalar_lea.sflag [#allocation4], 1
    %11 = vsyncpa %s10, 0
    %12 = vsyncpa [#allocation6], 0
    %13 = vsyncpa [#allocation5], 0
    %s14 = scalar_lea.sflag [#allocation5], 1
    %15 = vsyncpa %s14, 0
    loop: start=0, step=1, limit=5
    $region2: #{tpu_custom_call.1} parent=1 // loop_pre_header
      _
    $region3: #{tpu_custom_call.1} parent=1 // loop_header
      %s17 = sphi 0, %s21
      %p18 = scmp.ge.s32.totalorder %s17, 5
      %s27 = sphi 0, %s29
      %s30 = sphi 0, %s27
      %s31 = sphi 0, %s30
      %s47 = sphi 0, %s31
      %s51 = sphi 0, %s51
      %s53 = sphi 0, %s51
      %s54 = sphi 0, %s53
      %s68 = sphi 0, %s54
      %s72 = sphi 0, %s72
      %s74 = sphi 0, %s72
      %s75 = sphi 0, %s74
      %s89 = sphi 0, %s75
      %s95 = sphi 0, %s97
      %s98 = sphi 0, %s95
      %s99 = sphi 0, %s98
      %s115 = sphi 0, %s99
    $region4: #{tpu_custom_call.1} parent=1 // loop_header_branch
      %20 = sbr.rel (%p18) target = $region8
    $region5: #{tpu_custom_call.1} parent=1 // loop_body
      %s22 = ssub.s32 %s17, 1
      %s23 = ssub.s32 %s17, 2
      %s24 = sadd.s32 %s17, 1
      %s25 = ssub.s32 %s17, %s24
      %p26 = scmp.eq.s32.totalorder %s25, 0
      %s28 = sadd.s32 %s27, 1
      %s29 = scalar_select %p26, %s27, %s28
      %p32 = pneg %p26
      %p33 = scmp.eq.s32.totalorder %s17, 2
      %p34 = por %p32, %p33
      %p35 = scmp.ne.s32.totalorder %s27, %s30
      %p36 = scmp.eq.s32.totalorder %s17, 0
      %p37 = por %p35, %p36
      %p38 = scmp.ne.s32.totalorder %s27, %s30
      %p39 = scmp.eq.s32.totalorder %s22, 2
      %p40 = por %p38, %p39
      %p41 = scmp.ne.s32.totalorder %s30, %s31
      %p42 = scmp.eq.s32.totalorder %s22, 0
      %p43 = por %p41, %p42
      %p44 = scmp.ne.s32.totalorder %s30, %s31
      %p45 = scmp.eq.s32.totalorder %s23, 2
      %p46 = por %p44, %p45
      %p48 = scmp.ne.s32.totalorder %s31, %s47
      %p49 = scmp.eq.s32.totalorder %s23, 0
      %p50 = por %p48, %p49
      %s52 = sadd.s32 %s51, 1
      %p55 = scmp.eq.s32.totalorder %s17, 2
      %p56 = scmp.ne.s32.totalorder %s51, %s53
      %p57 = scmp.eq.s32.totalorder %s17, 0
      %p58 = por %p56, %p57
      %p59 = scmp.ne.s32.totalorder %s51, %s53
      %p60 = scmp.eq.s32.totalorder %s22, 2
      %p61 = por %p59, %p60
      %p62 = scmp.ne.s32.totalorder %s53, %s54
      %p63 = scmp.eq.s32.totalorder %s22, 0
      %p64 = por %p62, %p63
      %p65 = scmp.ne.s32.totalorder %s53, %s54
      %p66 = scmp.eq.s32.totalorder %s23, 2
      %p67 = por %p65, %p66
      %p69 = scmp.ne.s32.totalorder %s54, %s68
      %p70 = scmp.eq.s32.totalorder %s23, 0
      %p71 = por %p69, %p70
      %s73 = sadd.s32 %s72, 1
      %p76 = scmp.eq.s32.totalorder %s17, 2
      %p77 = scmp.ne.s32.totalorder %s72, %s74
      %p78 = scmp.eq.s32.totalorder %s17, 0
      %p79 = por %p77, %p78
      %p80 = scmp.ne.s32.totalorder %s72, %s74
      %p81 = scmp.eq.s32.totalorder %s22, 2
      %p82 = por %p80, %p81
      %p83 = scmp.ne.s32.totalorder %s74, %s75
      %p84 = scmp.eq.s32.totalorder %s22, 0
      %p85 = por %p83, %p84
      %p86 = scmp.ne.s32.totalorder %s74, %s75
      %p87 = scmp.eq.s32.totalorder %s23, 2
      %p88 = por %p86, %p87
      %p90 = scmp.ne.s32.totalorder %s75, %s89
      %p91 = scmp.eq.s32.totalorder %s23, 0
      %p92 = por %p90, %p91
      %s93 = ssub.s32 %s17, %s24
      %p94 = scmp.eq.s32.totalorder %s93, 0
      %s96 = sadd.s32 %s95, 1
      %s97 = scalar_select %p94, %s95, %s96
      %p100 = pneg %p94
      %p101 = scmp.eq.s32.totalorder %s17, 2
      %p102 = por %p100, %p101
      %p103 = scmp.ne.s32.totalorder %s95, %s98
      %p104 = scmp.eq.s32.totalorder %s17, 0
      %p105 = por %p103, %p104
      %p106 = scmp.ne.s32.totalorder %s95, %s98
      %p107 = scmp.eq.s32.totalorder %s22, 2
      %p108 = por %p106, %p107
      %p109 = scmp.ne.s32.totalorder %s98, %s99
      %p110 = scmp.eq.s32.totalorder %s22, 0
      %p111 = por %p109, %p110
      %p112 = scmp.ne.s32.totalorder %s98, %s99
      %p113 = scmp.eq.s32.totalorder %s23, 2
      %p114 = por %p112, %p113
      %p116 = scmp.ne.s32.totalorder %s99, %s115
      %p117 = scmp.eq.s32.totalorder %s23, 0
      %p118 = por %p116, %p117
      %p119 = scmp.le.s32.totalorder 1, %s17
      %p120 = scmp.lt.s32.totalorder %s17, 4
      %p121 = pnand %p119, %p120
      %p122 = pneg %p121
      // Predicated region
      $region9: #{tpu_custom_call.1} parent=5 // pred_check
        _
      $region10: #{tpu_custom_call.1} parent=5 // pred_check_branch
        %124 = sbr.rel (%p121) target = $region12
      $region11: #{tpu_custom_call.1} parent=5 // pred_region
        %s125 = ssub.s32 %s17, 1
        // Predicated region
        $region13: #{tpu_custom_call.1} parent=11 // pred_check
          %p126 = pneg %p64
        $region14: #{tpu_custom_call.1} parent=11 // pred_check_branch
          %128 = sbr.rel (%p126) target = $region16
        $region15: #{tpu_custom_call.1} parent=11 // pred_region
          %s130 = ssub.s32 16, 16
          %131 = vsyncadd [#allocation6], %s130
          %s133 = sshll.u32 %s1, 4
          %s134 = int_to_ptr.vmem [resolvable:$true] %s133
          %136 = dma.vmem_to_smem %s134, 16, [#allocation7], [#allocation6]
        $region16: #{tpu_custom_call.1} parent=11 // pred_fallthru
          _
        // Predicated region
        $region17: #{tpu_custom_call.1} parent=11 // pred_check
          %p137 = pneg %p85
        $region18: #{tpu_custom_call.1} parent=11 // pred_check_branch
          %139 = sbr.rel (%p137) target = $region20
        $region19: #{tpu_custom_call.1} parent=11 // pred_region
          _
        $region20: #{tpu_custom_call.1} parent=11 // pred_fallthru
          _
      $region12: #{tpu_custom_call.1} parent=5 // pred_fallthru
        _
      %p140 = scmp.lt.s32.totalorder %s17, 3
      // Predicated region
      $region21: #{tpu_custom_call.1} parent=5 // pred_check
        %p141 = pneg %p140
      $region22: #{tpu_custom_call.1} parent=5 // pred_check_branch
        %143 = sbr.rel (%p141) target = $region24
      $region23: #{tpu_custom_call.1} parent=5 // pred_region
        // Predicated region
        $region25: #{tpu_custom_call.1} parent=23 // pred_check
          %p144 = pneg %p37
        $region26: #{tpu_custom_call.1} parent=23 // pred_check_branch
          %146 = sbr.rel (%p144) target = $region28
        $region27: #{tpu_custom_call.1} parent=23 // pred_region
          %s147 = sand.u32 %s27, 1
          %s148 = scalar_lea.sflag [#allocation4], %s147
          %s149 = sand.u32 %s27, 1
          %s150 = smul.addr %s149, 32
          %s151 = scalar_lea.vmem [#allocation3], %s150
          %s153 = ssub.s32 512, 512
          %154 = vsyncadd %s148, %s153
          %s155 = smul.addr %s17, 128
          %s156 = scalar_lea.hbm %s0, %s155
          %s157 = sshll.u32 %s151, 4
          %s158 = int_to_ptr.vmem [resolvable:$true] %s157
          %163 = dma.hbm_to_vmem [thread:$0]  %s156, 512, %s158, %s148, 384, 128, 8
        $region28: #{tpu_custom_call.1} parent=23 // pred_fallthru
          _
      $region24: #{tpu_custom_call.1} parent=5 // pred_fallthru
        _
      %p164 = scmp.le.s32.totalorder 1, %s17
      %p165 = scmp.lt.s32.totalorder %s17, 4
      %p166 = pnand %p164, %p165
      %p167 = pneg %p166
      // Predicated region
      $region29: #{tpu_custom_call.1} parent=5 // pred_check
        _
      $region30: #{tpu_custom_call.1} parent=5 // pred_check_branch
        %169 = sbr.rel (%p166) target = $region32
      $region31: #{tpu_custom_call.1} parent=5 // pred_region
        %s170 = ssub.s32 %s17, 1
        %s171 = sand.u32 %s30, 1
        %s172 = scalar_lea.sflag [#allocation4], %s171
        %s173 = sand.u32 %s30, 1
        %s174 = smul.addr %s173, 32
        %s175 = scalar_lea.vmem [#allocation3], %s174
        // Predicated region
        $region33: #{tpu_custom_call.1} parent=31 // pred_check
          %p176 = pneg %p43
        $region34: #{tpu_custom_call.1} parent=31 // pred_check_branch
          %178 = sbr.rel (%p176) target = $region36
        $region35: #{tpu_custom_call.1} parent=31 // pred_region
          %179 = dma.done %s172, 512
        $region36: #{tpu_custom_call.1} parent=31 // pred_fallthru
          _
        // Predicated region
        $region37: #{tpu_custom_call.1} parent=31 // pred_check
          %p180 = pneg %p64
        $region38: #{tpu_custom_call.1} parent=31 // pred_check_branch
          %182 = sbr.rel (%p180) target = $region40
        $region39: #{tpu_custom_call.1} parent=31 // pred_region
          %183 = dma.done [#allocation6], 16
        $region40: #{tpu_custom_call.1} parent=31 // pred_fallthru
          _
        %184 = sfence
        %s185 = sand.u32 %s30, 1
        %s186 = scalar_lea.sflag [#allocation4], %s185
        %s187 = sand.u32 %s30, 1
        %s188 = smul.addr %s187, 32
        %s189 = scalar_lea.vmem [#allocation3], %s188
        %p190 = pneg %p43
        %p191 = pneg %p40
        %p192 = pneg %p64
        %p193 = pneg %p61
        %p194 = pneg %p85
        %p195 = pneg %p82
        %p196 = pneg %p111
        %p197 = pneg %p108
        %s198 = sand.u32 %s98, 1
        %s199 = scalar_lea.sflag [#allocation5], %s198
        %s200 = sand.u32 %s98, 1
        %s201 = smul.addr %s200, 8
        %s202 = scalar_lea.vmem [#allocation8], %s201
        %v203 = vld [vmem:[%s175] sm:$0xff]
        %s204 = scalar_lea.vmem %s175, 8 [#allocation3]
        %v205 = vld [vmem:[%s204] sm:$0xff]
        %s206 = scalar_lea.vmem %s175, 16 [#allocation3]
        %v207 = vld [vmem:[%s206] sm:$0xff]
        %s208 = scalar_lea.vmem %s175, 24 [#allocation3]
        %v209 = vld [vmem:[%s208] sm:$0xff]
        %s210 = sld [smem:[#allocation7]]
        %s211 = sld [smem:[#allocation7 + $0x1]]
        %s212 = sld [smem:[#allocation7 + $0x2]]
        %s213 = sld [smem:[#allocation7 + $0x3]]
        %s214 = sld [smem:[#allocation7 + $0x4]]
        %s215 = sld [smem:[#allocation7 + $0x5]]
        %s216 = sld [smem:[#allocation7 + $0x6]]
        %s217 = sld [smem:[#allocation7 + $0x7]]
        %s218 = sld [smem:[#allocation7 + $0x8]]
        %s219 = sld [smem:[#allocation7 + $0x9]]
        %s220 = sld [smem:[#allocation2]]
        %v221 = vmul.f32 %v203, %v203
        %v222 = vstv %s210
        %v223 = vmul.f32 %v222, %v221
        %v224 = vmul.f32 %v205, %v205
        %v225 = vstv %s211
        %v226 = vmul.f32 %v225, %v224
        %v227 = vadd.f32 %v223, %v226
        %v228 = vmul.f32 %v207, %v207
        %v229 = vstv %s212
        %v230 = vmul.f32 %v229, %v228
        %v231 = vadd.f32 %v227, %v230
        %v232 = vmul.f32 %v209, %v209
        %v233 = vstv %s213
        %v234 = vmul.f32 %v233, %v232
        %v235 = vadd.f32 %v231, %v234
        %v236 = vmul.f32 %v203, %v205
        %v237 = vstv %s214
        %v238 = vmul.f32 %v237, %v236
        %v239 = vadd.f32 %v235, %v238
        %v240 = vmul.f32 %v203, %v207
        %v241 = vstv %s215
        %v242 = vmul.f32 %v241, %v240
        %v243 = vadd.f32 %v239, %v242
        %v244 = vmul.f32 %v203, %v209
        %v245 = vstv %s216
        %v246 = vmul.f32 %v245, %v244
        %v247 = vadd.f32 %v243, %v246
        %v248 = vmul.f32 %v205, %v207
        %v249 = vstv %s217
        %v250 = vmul.f32 %v249, %v248
        %v251 = vadd.f32 %v247, %v250
        %v252 = vmul.f32 %v205, %v209
        %v253 = vstv %s218
        %v254 = vmul.f32 %v253, %v252
        %v255 = vadd.f32 %v251, %v254
        %v256 = vmul.f32 %v207, %v209
        %v257 = vstv %s219
        %v258 = vmul.f32 %v257, %v256
        %v259 = vadd.f32 %v255, %v258
        %v260 = vstv %s220
        %v261 = vadd.f32 %v259, %v260
        %262 = vst [vmem:[%s202] sm:$0xff] %v261
        %s263 = sand.u32 %s98, 1
        %s264 = scalar_lea.sflag [#allocation5], %s263
        %s265 = sand.u32 %s98, 1
        %s266 = smul.addr %s265, 8
        %s267 = scalar_lea.vmem [#allocation8], %s266
        // Predicated region
        $region41: #{tpu_custom_call.1} parent=31 // pred_check
          %p268 = pneg %p108
        $region42: #{tpu_custom_call.1} parent=31 // pred_check_branch
          %270 = sbr.rel (%p268) target = $region44
        $region43: #{tpu_custom_call.1} parent=31 // pred_region
          %s272 = ssub.s32 128, 128
          %273 = vsyncadd %s264, %s272
          %s274 = smul.addr %s22, 128
          %s275 = scalar_lea.hbm %s3, %s274
          %s277 = sshll.u32 %s267, 4
          %s278 = int_to_ptr.vmem [resolvable:$true] %s277
          %280 = dma.vmem_to_hbm [thread:$0]  %s278, 128, %s275, %s264
        $region44: #{tpu_custom_call.1} parent=31 // pred_fallthru
          _
      $region32: #{tpu_custom_call.1} parent=5 // pred_fallthru
        _
      %p281 = scmp.le.s32.totalorder 2, %s17
      // Predicated region
      $region45: #{tpu_custom_call.1} parent=5 // pred_check
        %p282 = pneg %p281
      $region46: #{tpu_custom_call.1} parent=5 // pred_check_branch
        %284 = sbr.rel (%p282) target = $region48
      $region47: #{tpu_custom_call.1} parent=5 // pred_region
        %s285 = ssub.s32 %s17, 2
        // Predicated region
        $region49: #{tpu_custom_call.1} parent=47 // pred_check
          %p286 = pneg %p114
        $region50: #{tpu_custom_call.1} parent=47 // pred_check_branch
          %288 = sbr.rel (%p286) target = $region52
        $region51: #{tpu_custom_call.1} parent=47 // pred_region
          %s289 = sand.u32 %s99, 1
          %s290 = scalar_lea.sflag [#allocation5], %s289
          %s291 = sand.u32 %s99, 1
          %s292 = smul.addr %s291, 8
          %s293 = scalar_lea.vmem [#allocation8], %s292
          %294 = dma.done %s290, 128
        $region52: #{tpu_custom_call.1} parent=47 // pred_fallthru
          _
      $region48: #{tpu_custom_call.1} parent=5 // pred_fallthru
        _
    $region6: #{tpu_custom_call.1} parent=1 // loop_footer
      %s21 = sadd.s32 1, %s17
    $region7: #{tpu_custom_call.1} parent=1 // loop_footer_branch
      %16 = sbr.rel target = $region3
    $region8: #{tpu_custom_call.1} parent=1 // loop_exit
      _
    %295 = vsyncpa [#allocation4], 1
    %s296 = scalar_lea.sflag [#allocation4], 1
    %297 = vsyncpa %s296, 1
    %298 = vsyncpa [#allocation5], 1
    %s299 = scalar_lea.sflag [#allocation5], 1
    %300 = vsyncpa %s299, 1
    %301 = vsyncpa [#allocation6], 1
    %s302 = scalar_lea.sflag [#allocation6], 1
    %303 = vsyncpa %s302, 1

</llo_original>
